<compile_context>
chip_gen: v7x
topology: tpu7x:2x2x1
jax: 0.10.0
libtpu: 0.0.40
codegen_flags: <defaults>
</compile_context>

<pallas_src>
import functools

import jax
import jax.numpy as jnp
from jax.experimental import pallas as pl
from jax.experimental.pallas import tpu as pltpu

HIDDEN = 64          # logical hidden size of the PyTorch module
HIDDEN_PAD = 128     # lane-dense padded hidden size used inside the kernel


def _round_up(x, m):
    return ((x + m - 1) // m) * m


def ppo_mlp_kernel(x_ref, w1_ref, b1_ref, w2_ref, b2_ref, w3_ref, b3_ref, o_ref):
    """Fused 3-layer MLP (Linear-ReLU-Linear-ReLU-Linear) on one batch tile.

    x / weights are bf16, accumulation is f32 on the MXU, bias-add and ReLU in f32.
    """
    x = x_ref[...]
    h1 = jnp.dot(x, w1_ref[...], preferred_element_type=jnp.float32) + b1_ref[...]
    h1 = jnp.maximum(h1, 0.0).astype(w2_ref.dtype)
    h2 = jnp.dot(h1, w2_ref[...], preferred_element_type=jnp.float32) + b2_ref[...]
    h2 = jnp.maximum(h2, 0.0).astype(w3_ref.dtype)
    out = jnp.dot(h2, w3_ref[...], preferred_element_type=jnp.float32) + b3_ref[...]
    o_ref[...] = out.astype(o_ref.dtype)


def _pad_params(params):
    """Zero-pad hidden 64->128 and cast weights to bf16 (biases stay f32)."""
    w1, b1, w2, b2, w3, b3 = params
    in_dim = w1.shape[0]
    out_dim = w3.shape[1]
    pad_h = HIDDEN_PAD - HIDDEN

    w1p = jnp.pad(w1, ((0, 0), (0, pad_h))).astype(jnp.bfloat16)          # [in, 128]
    b1p = jnp.pad(b1, ((0, 0), (0, pad_h))).astype(jnp.float32)           # [1, 128]
    w2p = jnp.pad(w2, ((0, pad_h), (0, pad_h))).astype(jnp.bfloat16)      # [128, 128]
    b2p = jnp.pad(b2, ((0, 0), (0, pad_h))).astype(jnp.float32)           # [1, 128]
    w3p = jnp.pad(w3, ((0, pad_h), (0, 0))).astype(jnp.bfloat16)          # [128, out]
    b3p = b3.astype(jnp.float32)                                          # [1, out]
    return w1p, b1p, w2p, b2p, w3p, b3p, in_dim, out_dim


def _choose_tile(B, tile_b):
    """Pick a batch tile: big (amortize step overhead) but keep >=2 grid steps
    when the batch allows it so v7x can shard the 'parallel' axis across cores."""
    if B >= 16:
        tile = min(tile_b, _round_up(pl.cdiv(B, 2), 8))
    else:
        tile = _round_up(B, 8)
    return max(tile, 8)


@functools.partial(jax.jit, static_argnames=("tile_b",))
def ppo_policy_forward(x, params, *, tile_b=1024):
    """Run the PPOPolicy MLP with a fused Pallas kernel, tiled over the batch."""
    B, _ = x.shape
    w1p, b1p, w2p, b2p, w3p, b3p, in_dim, out_dim = _pad_params(params)

    tile = _choose_tile(B, tile_b)
    grid_n = pl.cdiv(B, tile)
    B_pad = grid_n * tile

    x_bf16 = x.astype(jnp.bfloat16)
    if B_pad != B:
        x_bf16 = jnp.pad(x_bf16, ((0, B_pad - B), (0, 0)))

    Hp = HIDDEN_PAD
    # x / output are tiled over the batch; weights & biases are resident blocks.
    x_spec = pl.BlockSpec((tile, in_dim), lambda i: (i, 0))
    w1_spec = pl.BlockSpec((in_dim, Hp), lambda i: (0, 0))
    b1_spec = pl.BlockSpec((1, Hp), lambda i: (0, 0))
    w2_spec = pl.BlockSpec((Hp, Hp), lambda i: (0, 0))
    b2_spec = pl.BlockSpec((1, Hp), lambda i: (0, 0))
    w3_spec = pl.BlockSpec((Hp, out_dim), lambda i: (0, 0))
    b3_spec = pl.BlockSpec((1, out_dim), lambda i: (0, 0))
    o_spec = pl.BlockSpec((tile, out_dim), lambda i: (i, 0))

    weight_bytes = 2 * (in_dim * Hp + Hp * Hp + Hp * out_dim) + 4 * (2 * Hp + out_dim)
    cost = pl.CostEstimate(
        flops=2 * B_pad * (in_dim * Hp + Hp * Hp + Hp * out_dim),
        transcendentals=0,
        bytes_accessed=B_pad * in_dim * 2 + B_pad * out_dim * 4 + weight_bytes,
    )

    out = pl.pallas_call(
        ppo_mlp_kernel,
        out_shape=jax.ShapeDtypeStruct((B_pad, out_dim), jnp.float32),
        grid_spec=pltpu.PrefetchScalarGridSpec(
            num_scalar_prefetch=0,
            grid=(grid_n,),
            in_specs=[x_spec, w1_spec, b1_spec, w2_spec, b2_spec, w3_spec, b3_spec],
            out_specs=o_spec,
        ),
        compiler_params=pltpu.CompilerParams(
            dimension_semantics=("parallel",),
        ),
        cost_estimate=cost,
    )(x_bf16, w1p, b1p, w2p, b2p, w3p, b3p)

    if B_pad != B:
        out = out[:B]
    return out


def init_params(key, input_dim, output_dim, hidden=HIDDEN):
    """Deterministic synthetic init (shapes match the PyTorch module)."""
    ks = jax.random.split(key, 6)
    # Stored as [in, out]; PyTorch's nn.Linear weight is [out, in].
    w1 = jax.random.normal(ks[0], (input_dim, hidden), jnp.float32) * 0.1
    b1 = jax.random.normal(ks[1], (1, hidden), jnp.float32) * 0.01
    w2 = jax.random.normal(ks[2], (hidden, hidden), jnp.float32) * 0.1
    b2 = jax.random.normal(ks[3], (1, hidden), jnp.float32) * 0.01
    w3 = jax.random.normal(ks[4], (hidden, output_dim), jnp.float32) * 0.1
    b3 = jax.random.normal(ks[5], (1, output_dim), jnp.float32) * 0.01
    return (w1, b1, w2, b2, w3, b3)


def reference_forward(x, params):
    w1, b1, w2, b2, w3, b3 = params
    h1 = jnp.maximum(x @ w1 + b1, 0.0)
    h2 = jnp.maximum(h1 @ w2 + b2, 0.0)
    return h2 @ w3 + b3


if __name__ == "__main__":
    key = jax.random.PRNGKey(0)
    k_x, k_p = jax.random.split(key)

    batch = 16          # exercises a 2-step grid (tile=8 at this small batch)
    input_dim = 32
    output_dim = 8

    x = jax.random.normal(k_x, (batch, input_dim), jnp.float32)
    params = init_params(k_p, input_dim, output_dim)

    out = ppo_policy_forward(x, params, tile_b=1024)
    out = jax.block_until_ready(out)

    ref = reference_forward(x, params)
    assert out.shape == (batch, output_dim), out.shape
    # bf16 inputs/weights with f32 accumulation -> loosen tolerance vs f32 ref.
    assert jnp.allclose(out, ref, atol=2e-2, rtol=2e-2), "mismatch vs reference"

    print("KERNEL_OK")
</pallas_src>

<mosaic_0001>
module attributes {stable_mosaic.version = 11 : i64} {
  func.func @ppo_mlp_kernel(%arg0: i32, %arg1: memref<8x32xbf16, #tpu.memory_space<vmem>>, %arg2: memref<32x128xbf16, #tpu.memory_space<vmem>>, %arg3: memref<1x128xf32, #tpu.memory_space<vmem>>, %arg4: memref<128x128xbf16, #tpu.memory_space<vmem>>, %arg5: memref<1x128xf32, #tpu.memory_space<vmem>>, %arg6: memref<128x8xbf16, #tpu.memory_space<vmem>>, %arg7: memref<1x8xf32, #tpu.memory_space<vmem>>, %arg8: memref<8x8xf32, #tpu.memory_space<vmem>>) attributes {dimension_semantics = [#tpu.dimension_semantics<parallel>], iteration_bounds = array<i64: 2>, scalar_prefetch = 0 : i64, scratch_operands = 0 : i64, tpu.core_type = #tpu.core_type<tc>, window_params = [{transform_indices = @transform_0, window_bounds = array<i64: 8, 32>}, {pipeline_mode = #tpu.pipeline_mode<synchronous>, transform_indices = @transform_1, window_bounds = array<i64: 32, 128>}, {pipeline_mode = #tpu.pipeline_mode<synchronous>, transform_indices = @transform_2, window_bounds = array<i64: 1, 128>}, {pipeline_mode = #tpu.pipeline_mode<synchronous>, transform_indices = @transform_3, window_bounds = array<i64: 128, 128>}, {pipeline_mode = #tpu.pipeline_mode<synchronous>, transform_indices = @transform_4, window_bounds = array<i64: 1, 128>}, {pipeline_mode = #tpu.pipeline_mode<synchronous>, transform_indices = @transform_5, window_bounds = array<i64: 128, 8>}, {pipeline_mode = #tpu.pipeline_mode<synchronous>, transform_indices = @transform_6, window_bounds = array<i64: 1, 8>}, {transform_indices = @transform_7, window_bounds = array<i64: 8, 8>}]} {
    %c0 = arith.constant 0 : index
    %c0_0 = arith.constant 0 : index
    %0 = vector.load %arg1[%c0, %c0_0] : memref<8x32xbf16, #tpu.memory_space<vmem>>, vector<8x32xbf16>
    %c0_1 = arith.constant 0 : index
    %c0_2 = arith.constant 0 : index
    %1 = vector.load %arg2[%c0_1, %c0_2] : memref<32x128xbf16, #tpu.memory_space<vmem>>, vector<32x128xbf16>
    %cst = arith.constant dense<0.000000e+00> : vector<8x128xf32>
    %2 = tpu.matmul %0, %1, %cst {dimension_numbers = #tpu.dot_dimension_numbers<[1], [0], [0], [1], [0, 0, 1, 1], [], []>} : vector<8x32xbf16>, vector<32x128xbf16>, vector<8x128xf32> -> vector<8x128xf32>
    %c0_3 = arith.constant 0 : index
    %c0_4 = arith.constant 0 : index
    %3 = vector.load %arg3[%c0_3, %c0_4] : memref<1x128xf32, #tpu.memory_space<vmem>>, vector<1x128xf32>
    %4 = vector.broadcast %3 : vector<1x128xf32> to vector<8x128xf32>
    %5 = arith.addf %2, %4 : vector<8x128xf32>
    %cst_5 = arith.constant 0.000000e+00 : f32
    %6 = vector.broadcast %cst_5 : f32 to vector<8x128xf32>
    %7 = arith.maximumf %5, %6 : vector<8x128xf32>
    %8 = arith.truncf %7 : vector<8x128xf32> to vector<8x128xbf16>
    %c0_6 = arith.constant 0 : index
    %c0_7 = arith.constant 0 : index
    %9 = vector.load %arg4[%c0_6, %c0_7] : memref<128x128xbf16, #tpu.memory_space<vmem>>, vector<128x128xbf16>
    %cst_8 = arith.constant dense<0.000000e+00> : vector<8x128xf32>
    %10 = tpu.matmul %8, %9, %cst_8 {dimension_numbers = #tpu.dot_dimension_numbers<[1], [0], [0], [1], [0, 0, 1, 1], [], []>} : vector<8x128xbf16>, vector<128x128xbf16>, vector<8x128xf32> -> vector<8x128xf32>
    %c0_9 = arith.constant 0 : index
    %c0_10 = arith.constant 0 : index
    %11 = vector.load %arg5[%c0_9, %c0_10] : memref<1x128xf32, #tpu.memory_space<vmem>>, vector<1x128xf32>
    %12 = vector.broadcast %11 : vector<1x128xf32> to vector<8x128xf32>
    %13 = arith.addf %10, %12 : vector<8x128xf32>
    %cst_11 = arith.constant 0.000000e+00 : f32
    %14 = vector.broadcast %cst_11 : f32 to vector<8x128xf32>
    %15 = arith.maximumf %13, %14 : vector<8x128xf32>
    %16 = arith.truncf %15 : vector<8x128xf32> to vector<8x128xbf16>
    %c0_12 = arith.constant 0 : index
    %c0_13 = arith.constant 0 : index
    %17 = vector.load %arg6[%c0_12, %c0_13] : memref<128x8xbf16, #tpu.memory_space<vmem>>, vector<128x8xbf16>
    %cst_14 = arith.constant dense<0.000000e+00> : vector<8x8xf32>
    %18 = tpu.matmul %16, %17, %cst_14 {dimension_numbers = #tpu.dot_dimension_numbers<[1], [0], [0], [1], [0, 0, 1, 1], [], []>} : vector<8x128xbf16>, vector<128x8xbf16>, vector<8x8xf32> -> vector<8x8xf32>
    %c0_15 = arith.constant 0 : index
    %c0_16 = arith.constant 0 : index
    %19 = vector.load %arg7[%c0_15, %c0_16] : memref<1x8xf32, #tpu.memory_space<vmem>>, vector<1x8xf32>
    %20 = vector.broadcast %19 : vector<1x8xf32> to vector<8x8xf32>
    %21 = arith.addf %18, %20 : vector<8x8xf32>
    %c0_17 = arith.constant 0 : index
    %c0_18 = arith.constant 0 : index
    %22 = vector.load %arg8[%c0_17, %c0_18] : memref<8x8xf32, #tpu.memory_space<vmem>>, vector<8x8xf32>
    tpu.vector_store %arg8[%c0_17, %c0_18], %21 {strides = array<i32>} : memref<8x8xf32, #tpu.memory_space<vmem>>, vector<8x8xf32>,
    return
  }
  func.func @transform_0(%arg0: i32) -> (i32, i32) {
    %c0_i32 = arith.constant 0 : i32
    %c0_i32_0 = arith.constant 0 : i32
    return %arg0, %c0_i32 : i32, i32
  }
  func.func @transform_1(%arg0: i32) -> (i32, i32) {
    %c0_i32 = arith.constant 0 : i32
    %c0_i32_0 = arith.constant 0 : i32
    %c0_i32_1 = arith.constant 0 : i32
    return %c0_i32, %c0_i32_0 : i32, i32
  }
  func.func @transform_2(%arg0: i32) -> (i32, i32) {
    %c0_i32 = arith.constant 0 : i32
    %c0_i32_0 = arith.constant 0 : i32
    %c0_i32_1 = arith.constant 0 : i32
    return %c0_i32, %c0_i32_0 : i32, i32
  }
  func.func @transform_3(%arg0: i32) -> (i32, i32) {
    %c0_i32 = arith.constant 0 : i32
    %c0_i32_0 = arith.constant 0 : i32
    %c0_i32_1 = arith.constant 0 : i32
    return %c0_i32, %c0_i32_0 : i32, i32
  }
  func.func @transform_4(%arg0: i32) -> (i32, i32) {
    %c0_i32 = arith.constant 0 : i32
    %c0_i32_0 = arith.constant 0 : i32
    %c0_i32_1 = arith.constant 0 : i32
    return %c0_i32, %c0_i32_0 : i32, i32
  }
  func.func @transform_5(%arg0: i32) -> (i32, i32) {
    %c0_i32 = arith.constant 0 : i32
    %c0_i32_0 = arith.constant 0 : i32
    %c0_i32_1 = arith.constant 0 : i32
    return %c0_i32, %c0_i32_0 : i32, i32
  }
  func.func @transform_6(%arg0: i32) -> (i32, i32) {
    %c0_i32 = arith.constant 0 : i32
    %c0_i32_0 = arith.constant 0 : i32
    %c0_i32_1 = arith.constant 0 : i32
    return %c0_i32, %c0_i32_0 : i32, i32
  }
  func.func @transform_7(%arg0: i32) -> (i32, i32) {
    %c0_i32 = arith.constant 0 : i32
    %c0_i32_0 = arith.constant 0 : i32
    return %arg0, %c0_i32 : i32, i32
  }
}

</mosaic_0001>

<llo_original>
// kernel: ppo_policy_forward.1
$region0: #{ppo_policy_forward.1}
  #allocation0 [shape = 'u32[]', space=smem, size = 0x4, offset = 0x4, fixed_abs, tag = 'smem constant byte address 0x4 - core index']
  #allocation1 [shape = 'u32[144,128]{1,0:T(1,128)}', space=vmem, size = 0x12000, scoped, tag = 'internal scratch']
  %s0 = inlined_call_operand.vmem [shape: bf16[16,32], index: 0, kind: input, shape index: {}]
  %s1 = inlined_call_operand.vmem [shape: bf16[32,128], index: 1, kind: input, shape index: {}]
  %s2 = inlined_call_operand.vmem [shape: f32[1,128], index: 2, kind: input, shape index: {}]
  %s3 = inlined_call_operand.vmem [shape: bf16[128,128], index: 3, kind: input, shape index: {}]
  %s4 = inlined_call_operand.vmem [shape: f32[1,128], index: 4, kind: input, shape index: {}]
  %s5 = inlined_call_operand.vmem [shape: bf16[128,8], index: 5, kind: input, shape index: {}]
  %s6 = inlined_call_operand.vmem [shape: f32[1,8], index: 6, kind: input, shape index: {}]
  %s7 = inlined_call_operand.vmem [shape: f32[16,8], index: 7, kind: output, shape index: {}]
  %s8 = sld [smem:[#allocation0]]
  $region61: #{ppo_policy_forward.1} parent=0
    _
  %s10 = ssub.s32 1, %s8
  %s11 = scalar_select 0, %s10, %s8
  loop: start=0, step=1, limit=4
  $region2: #{ppo_policy_forward.1} parent=0 // loop_pre_header
    _
  $region3: #{ppo_policy_forward.1} parent=0 // loop_header
    %s13 = sphi 0, %s17
    %p14 = scmp.ge.s32.totalorder %s13, 4
    %s23 = sphi 0, %s25
    %s26 = sphi 0, %s23
    %s27 = sphi 0, %s26
    %s43 = sphi 0, %s27
    %s47 = sphi 0, %s47
    %s49 = sphi 0, %s47
    %s50 = sphi 0, %s49
    %s64 = sphi 0, %s50
    %s68 = sphi 0, %s68
    %s70 = sphi 0, %s68
    %s71 = sphi 0, %s70
    %s85 = sphi 0, %s71
    %s89 = sphi 0, %s89
    %s91 = sphi 0, %s89
    %s92 = sphi 0, %s91
    %s106 = sphi 0, %s92
    %s110 = sphi 0, %s110
    %s112 = sphi 0, %s110
    %s113 = sphi 0, %s112
    %s127 = sphi 0, %s113
    %s131 = sphi 0, %s131
    %s133 = sphi 0, %s131
    %s134 = sphi 0, %s133
    %s148 = sphi 0, %s134
    %s152 = sphi 0, %s152
    %s154 = sphi 0, %s152
    %s155 = sphi 0, %s154
    %s169 = sphi 0, %s155
    %s175 = sphi 0, %s177
    %s178 = sphi 0, %s175
    %s179 = sphi 0, %s178
    %s195 = sphi 0, %s179
  $region4: #{ppo_policy_forward.1} parent=0 // loop_header_branch
    %16 = sbr.rel (%p14) target = $region8
  $region5: #{ppo_policy_forward.1} parent=0 // loop_body
    %s18 = ssub.s32 %s13, 1
    %s19 = ssub.s32 %s13, 2
    %s20 = sadd.s32 %s13, 1
    %s21 = ssub.s32 %s13, %s20
    %p22 = scmp.eq.s32.totalorder %s21, 0
    %s24 = sadd.s32 %s23, 1
    %s25 = scalar_select %p22, %s23, %s24
    %p28 = pneg %p22
    %p29 = scmp.eq.s32.totalorder %s13, 1
    %p30 = por %p28, %p29
    %p31 = scmp.ne.s32.totalorder %s23, %s26
    %p32 = scmp.eq.s32.totalorder %s13, 0
    %p33 = por %p31, %p32
    %p34 = scmp.ne.s32.totalorder %s23, %s26
    %p35 = scmp.eq.s32.totalorder %s18, 1
    %p36 = por %p34, %p35
    %p37 = scmp.ne.s32.totalorder %s26, %s27
    %p38 = scmp.eq.s32.totalorder %s18, 0
    %p39 = por %p37, %p38
    %p40 = scmp.ne.s32.totalorder %s26, %s27
    %p41 = scmp.eq.s32.totalorder %s19, 1
    %p42 = por %p40, %p41
    %p44 = scmp.ne.s32.totalorder %s27, %s43
    %p45 = scmp.eq.s32.totalorder %s19, 0
    %p46 = por %p44, %p45
    %s48 = sadd.s32 %s47, 1
    %p51 = scmp.eq.s32.totalorder %s13, 1
    %p52 = scmp.ne.s32.totalorder %s47, %s49
    %p53 = scmp.eq.s32.totalorder %s13, 0
    %p54 = por %p52, %p53
    %p55 = scmp.ne.s32.totalorder %s47, %s49
    %p56 = scmp.eq.s32.totalorder %s18, 1
    %p57 = por %p55, %p56
    %p58 = scmp.ne.s32.totalorder %s49, %s50
    %p59 = scmp.eq.s32.totalorder %s18, 0
    %p60 = por %p58, %p59
    %p61 = scmp.ne.s32.totalorder %s49, %s50
    %p62 = scmp.eq.s32.totalorder %s19, 1
    %p63 = por %p61, %p62
    %p65 = scmp.ne.s32.totalorder %s50, %s64
    %p66 = scmp.eq.s32.totalorder %s19, 0
    %p67 = por %p65, %p66
    %s69 = sadd.s32 %s68, 1
    %p72 = scmp.eq.s32.totalorder %s13, 1
    %p73 = scmp.ne.s32.totalorder %s68, %s70
    %p74 = scmp.eq.s32.totalorder %s13, 0
    %p75 = por %p73, %p74
    %p76 = scmp.ne.s32.totalorder %s68, %s70
    %p77 = scmp.eq.s32.totalorder %s18, 1
    %p78 = por %p76, %p77
    %p79 = scmp.ne.s32.totalorder %s70, %s71
    %p80 = scmp.eq.s32.totalorder %s18, 0
    %p81 = por %p79, %p80
    %p82 = scmp.ne.s32.totalorder %s70, %s71
    %p83 = scmp.eq.s32.totalorder %s19, 1
    %p84 = por %p82, %p83
    %p86 = scmp.ne.s32.totalorder %s71, %s85
    %p87 = scmp.eq.s32.totalorder %s19, 0
    %p88 = por %p86, %p87
    %s90 = sadd.s32 %s89, 1
    %p93 = scmp.eq.s32.totalorder %s13, 1
    %p94 = scmp.ne.s32.totalorder %s89, %s91
    %p95 = scmp.eq.s32.totalorder %s13, 0
    %p96 = por %p94, %p95
    %p97 = scmp.ne.s32.totalorder %s89, %s91
    %p98 = scmp.eq.s32.totalorder %s18, 1
    %p99 = por %p97, %p98
    %p100 = scmp.ne.s32.totalorder %s91, %s92
    %p101 = scmp.eq.s32.totalorder %s18, 0
    %p102 = por %p100, %p101
    %p103 = scmp.ne.s32.totalorder %s91, %s92
    %p104 = scmp.eq.s32.totalorder %s19, 1
    %p105 = por %p103, %p104
    %p107 = scmp.ne.s32.totalorder %s92, %s106
    %p108 = scmp.eq.s32.totalorder %s19, 0
    %p109 = por %p107, %p108
    %s111 = sadd.s32 %s110, 1
    %p114 = scmp.eq.s32.totalorder %s13, 1
    %p115 = scmp.ne.s32.totalorder %s110, %s112
    %p116 = scmp.eq.s32.totalorder %s13, 0
    %p117 = por %p115, %p116
    %p118 = scmp.ne.s32.totalorder %s110, %s112
    %p119 = scmp.eq.s32.totalorder %s18, 1
    %p120 = por %p118, %p119
    %p121 = scmp.ne.s32.totalorder %s112, %s113
    %p122 = scmp.eq.s32.totalorder %s18, 0
    %p123 = por %p121, %p122
    %p124 = scmp.ne.s32.totalorder %s112, %s113
    %p125 = scmp.eq.s32.totalorder %s19, 1
    %p126 = por %p124, %p125
    %p128 = scmp.ne.s32.totalorder %s113, %s127
    %p129 = scmp.eq.s32.totalorder %s19, 0
    %p130 = por %p128, %p129
    %s132 = sadd.s32 %s131, 1
    %p135 = scmp.eq.s32.totalorder %s13, 1
    %p136 = scmp.ne.s32.totalorder %s131, %s133
    %p137 = scmp.eq.s32.totalorder %s13, 0
    %p138 = por %p136, %p137
    %p139 = scmp.ne.s32.totalorder %s131, %s133
    %p140 = scmp.eq.s32.totalorder %s18, 1
    %p141 = por %p139, %p140
    %p142 = scmp.ne.s32.totalorder %s133, %s134
    %p143 = scmp.eq.s32.totalorder %s18, 0
    %p144 = por %p142, %p143
    %p145 = scmp.ne.s32.totalorder %s133, %s134
    %p146 = scmp.eq.s32.totalorder %s19, 1
    %p147 = por %p145, %p146
    %p149 = scmp.ne.s32.totalorder %s134, %s148
    %p150 = scmp.eq.s32.totalorder %s19, 0
    %p151 = por %p149, %p150
    %s153 = sadd.s32 %s152, 1
    %p156 = scmp.eq.s32.totalorder %s13, 1
    %p157 = scmp.ne.s32.totalorder %s152, %s154
    %p158 = scmp.eq.s32.totalorder %s13, 0
    %p159 = por %p157, %p158
    %p160 = scmp.ne.s32.totalorder %s152, %s154
    %p161 = scmp.eq.s32.totalorder %s18, 1
    %p162 = por %p160, %p161
    %p163 = scmp.ne.s32.totalorder %s154, %s155
    %p164 = scmp.eq.s32.totalorder %s18, 0
    %p165 = por %p163, %p164
    %p166 = scmp.ne.s32.totalorder %s154, %s155
    %p167 = scmp.eq.s32.totalorder %s19, 1
    %p168 = por %p166, %p167
    %p170 = scmp.ne.s32.totalorder %s155, %s169
    %p171 = scmp.eq.s32.totalorder %s19, 0
    %p172 = por %p170, %p171
    %s173 = ssub.s32 %s13, %s20
    %p174 = scmp.eq.s32.totalorder %s173, 0
    %s176 = sadd.s32 %s175, 1
    %s177 = scalar_select %p174, %s175, %s176
    %p180 = pneg %p174
    %p181 = scmp.eq.s32.totalorder %s13, 1
    %p182 = por %p180, %p181
    %p183 = scmp.ne.s32.totalorder %s175, %s178
    %p184 = scmp.eq.s32.totalorder %s13, 0
    %p185 = por %p183, %p184
    %p186 = scmp.ne.s32.totalorder %s175, %s178
    %p187 = scmp.eq.s32.totalorder %s18, 1
    %p188 = por %p186, %p187
    %p189 = scmp.ne.s32.totalorder %s178, %s179
    %p190 = scmp.eq.s32.totalorder %s18, 0
    %p191 = por %p189, %p190
    %p192 = scmp.ne.s32.totalorder %s178, %s179
    %p193 = scmp.eq.s32.totalorder %s19, 1
    %p194 = por %p192, %p193
    %p196 = scmp.ne.s32.totalorder %s179, %s195
    %p197 = scmp.eq.s32.totalorder %s19, 0
    %p198 = por %p196, %p197
    %p199 = scmp.le.s32.totalorder 1, %s13
    %p200 = scmp.lt.s32.totalorder %s13, 3
    %p201 = pnand %p199, %p200
    %p202 = pneg %p201
    // Predicated region
    $region9: #{ppo_policy_forward.1} parent=5 // pred_check
      _
    $region10: #{ppo_policy_forward.1} parent=5 // pred_check_branch
      %204 = sbr.rel (%p201) target = $region12
    $region11: #{ppo_policy_forward.1} parent=5 // pred_region
      %s205 = ssub.s32 %s13, 1
      // Predicated region
      $region13: #{ppo_policy_forward.1} parent=11 // pred_check
        %p206 = pneg %p60
      $region14: #{ppo_policy_forward.1} parent=11 // pred_check_branch
        %208 = sbr.rel (%p206) target = $region16
      $region15: #{ppo_policy_forward.1} parent=11 // pred_region
        _
      $region16: #{ppo_policy_forward.1} parent=11 // pred_fallthru
        _
      // Predicated region
      $region17: #{ppo_policy_forward.1} parent=11 // pred_check
        %p209 = pneg %p81
      $region18: #{ppo_policy_forward.1} parent=11 // pred_check_branch
        %211 = sbr.rel (%p209) target = $region20
      $region19: #{ppo_policy_forward.1} parent=11 // pred_region
        _
      $region20: #{ppo_policy_forward.1} parent=11 // pred_fallthru
        _
      // Predicated region
      $region21: #{ppo_policy_forward.1} parent=11 // pred_check
        %p212 = pneg %p102
      $region22: #{ppo_policy_forward.1} parent=11 // pred_check_branch
        %214 = sbr.rel (%p212) target = $region24
      $region23: #{ppo_policy_forward.1} parent=11 // pred_region
        _
      $region24: #{ppo_policy_forward.1} parent=11 // pred_fallthru
        _
      // Predicated region
      $region25: #{ppo_policy_forward.1} parent=11 // pred_check
        %p215 = pneg %p123
      $region26: #{ppo_policy_forward.1} parent=11 // pred_check_branch
        %217 = sbr.rel (%p215) target = $region28
      $region27: #{ppo_policy_forward.1} parent=11 // pred_region
        _
      $region28: #{ppo_policy_forward.1} parent=11 // pred_fallthru
        _
      // Predicated region
      $region29: #{ppo_policy_forward.1} parent=11 // pred_check
        %p218 = pneg %p144
      $region30: #{ppo_policy_forward.1} parent=11 // pred_check_branch
        %220 = sbr.rel (%p218) target = $region32
      $region31: #{ppo_policy_forward.1} parent=11 // pred_region
        _
      $region32: #{ppo_policy_forward.1} parent=11 // pred_fallthru
        _
      // Predicated region
      $region33: #{ppo_policy_forward.1} parent=11 // pred_check
        %p221 = pneg %p165
      $region34: #{ppo_policy_forward.1} parent=11 // pred_check_branch
        %223 = sbr.rel (%p221) target = $region36
      $region35: #{ppo_policy_forward.1} parent=11 // pred_region
        _
      $region36: #{ppo_policy_forward.1} parent=11 // pred_fallthru
        _
    $region12: #{ppo_policy_forward.1} parent=5 // pred_fallthru
      _
    %p224 = scmp.lt.s32.totalorder %s13, 2
    // Predicated region
    $region37: #{ppo_policy_forward.1} parent=5 // pred_check
      %p225 = pneg %p224
    $region38: #{ppo_policy_forward.1} parent=5 // pred_check_branch
      %227 = sbr.rel (%p225) target = $region40
    $region39: #{ppo_policy_forward.1} parent=5 // pred_region
      // Predicated region
      $region41: #{ppo_policy_forward.1} parent=39 // pred_check
        %p228 = pneg %p33
      $region42: #{ppo_policy_forward.1} parent=39 // pred_check_branch
        %230 = sbr.rel (%p228) target = $region44
      $region43: #{ppo_policy_forward.1} parent=39 // pred_region
        %p231 = scmp.lt.s32.totalorder %s13, 1
        %s232 = scalar_select %p231, %s13, 1
        %s233 = smul.addr %s232, 4
        %s234 = scalar_lea.vmem %s0, %s233
      $region44: #{ppo_policy_forward.1} parent=39 // pred_fallthru
        _
    $region40: #{ppo_policy_forward.1} parent=5 // pred_fallthru
      _
    %p235 = scmp.le.s32.totalorder 1, %s13
    %p236 = scmp.lt.s32.totalorder %s13, 3
    %p237 = pnand %p235, %p236
    %p238 = pneg %p237
    // Predicated region
    $region45: #{ppo_policy_forward.1} parent=5 // pred_check
      _
    $region46: #{ppo_policy_forward.1} parent=5 // pred_check_branch
      %240 = sbr.rel (%p237) target = $region48
    $region47: #{ppo_policy_forward.1} parent=5 // pred_region
      %s241 = ssub.s32 %s13, 1
      %p242 = scmp.lt.s32.totalorder %s18, 1
      %s243 = scalar_select %p242, %s18, 1
      %s244 = smul.addr %s243, 4
      %s245 = scalar_lea.vmem %s0, %s244
      %p246 = pneg %p39
      %p247 = pneg %p36
      %p248 = pneg %p60
      %p249 = pneg %p57
      %p250 = pneg %p81
      %p251 = pneg %p78
      %p252 = pneg %p102
      %p253 = pneg %p99
      %p254 = pneg %p123
      %p255 = pneg %p120
      %p256 = pneg %p144
      %p257 = pneg %p141
      %p258 = pneg %p165
      %p259 = pneg %p162
      %p260 = pneg %p191
      %p261 = pneg %p188
      %p262 = scmp.lt.s32.totalorder %s18, 1
      %s263 = scalar_select %p262, %s18, 1
      %s264 = smul.addr %s263, 8
      %s265 = scalar_lea.vmem %s7, %s264
      %p266 = scmp.lt.s32.totalorder %s18, 1
      %s267 = scalar_select %p266, %s18, 1
      %s268 = smul.addr %s267, 4
      %s269 = scalar_lea.vmem %s0, %s268
      %p270 = scmp.lt.s32.totalorder %s18, 1
      %s271 = scalar_select %p270, %s18, 1
      %s272 = smul.addr %s271, 8
      %s273 = scalar_lea.vmem %s7, %s272
      %v275 = vld [vmem:[%s269] sm:$0xf]
      %v276 = vld [vmem:[%s1] sm:$0xf]
      %v277 = vld [vmem:[%s1 + $0x4] sm:$0xf]
      %v278 = vld [vmem:[%s1 + $0x8] sm:$0xf]
      %v279 = vld [vmem:[%s1 + $0xc] sm:$0xf]
      %v280 = vld [vmem:[%s2] sm:$0x1]
      %v282 = vlaneseq
      %v283 = vshrl.u32 %v282, 7
      %v284 = vsub.s32 0, %v283
      %v285 = vrot.slane %v280, %v284
      %v291 = vunpack.c.l.b16 %v276
      %v292 = vunpack.c.l.b16 %v277
      %v293 = vunpack.c.l.b16 %v278
      %v294 = vunpack.c.l.b16 %v279
      %v295 = vpack.c.b16 %v292, %v291
      %v296 = vpack.c.b16 %v294, %v293
      %vm299 = vcmask 261120
      %v301 = vsel %vm299, %v275, 0
      %303 = vmatprep.subr.bf16.mxu0 0
      %304 = vmatpush1.bf16.msra.mxu0 %v295
      %305 = vmatprep.subr.bf16.mxu0 0
      %306 = vmatpush1.bf16.msra.mxu0 %v296
      %307 = vmatprep.subr.bf16.mxu0 0
      %308 = vmatpush1.bf16.msra.mxu0 0
      %309 = vmatprep.subr.bf16.mxu0 0
      %310 = vmatpush1.bf16.msra.mxu0 0
      %311 = vmatprep.subr.bf16.mxu0 0
      %312 = vmatpush1.bf16.msra.mxu0 0
      %313 = vmatprep.subr.bf16.mxu0 0
      %314 = vmatpush1.bf16.msra.mxu0 0
      %315 = vmatprep.subr.bf16.mxu0 0
      %316 = vmatpush1.bf16.msra.mxu0 0
      %317 = vmatprep.subr.bf16.mxu0 0
      %318 = vmatpush1.bf16.msra.mxu0 0
      %319 = vmatprep.subr.bf16.mxu0 0
      %320 = vmatpush1.bf16.msra.mxu0 0
      %321 = vmatprep.subr.bf16.mxu0 0
      %322 = vmatpush1.bf16.msra.mxu0 0
      %323 = vmatprep.subr.bf16.mxu0 0
      %324 = vmatpush1.bf16.msra.mxu0 0
      %325 = vmatprep.subr.bf16.mxu0 0
      %326 = vmatpush1.bf16.msra.mxu0 0
      %327 = vmatprep.subr.bf16.mxu0 0
      %328 = vmatpush1.bf16.msra.mxu0 0
      %329 = vmatprep.subr.bf16.mxu0 0
      %330 = vmatpush1.bf16.msra.mxu0 0
      %331 = vmatprep.subr.bf16.mxu0 0
      %332 = vmatpush1.bf16.msra.mxu0 0
      %333 = vmatprep.subr.bf16.mxu0 0
      %334 = vmatpush1.bf16.msra.mxu0 0
      %335 = vmatprep.mubr.bf16.mxu0 0
      %336 = vmatmul.mubr.bf16.gmra.mrb[0].mxu0 %v301
      %v337 = vpop.f32.mrb[0].mxu0
      %v338 = vadd.f32 %v285, %v337
      %v339 = vpop.f32.mrb[0].mxu0
      %v340 = vpop.f32.mrb[0].mxu0
      %v341 = vpop.f32.mrb[0].mxu0
      %342 = vdwg.mxu0
      %v343 = vmax.f32 %v338, 0.0
      %v344 = vpack.c.bf16 %v343, %v343
      %v345 = vld [vmem:[%s3] sm:$0xf]
      %v346 = vld [vmem:[%s3 + $0x4] sm:$0xf]
      %v347 = vld [vmem:[%s3 + $0x8] sm:$0xf]
      %v348 = vld [vmem:[%s3 + $0xc] sm:$0xf]
      %v349 = vld [vmem:[%s3 + $0x10] sm:$0xf]
      %v350 = vld [vmem:[%s3 + $0x14] sm:$0xf]
      %v351 = vld [vmem:[%s3 + $0x18] sm:$0xf]
      %v352 = vld [vmem:[%s3 + $0x1c] sm:$0xf]
      %v353 = vld [vmem:[%s3 + $0x20] sm:$0xf]
      %v354 = vld [vmem:[%s3 + $0x24] sm:$0xf]
      %v355 = vld [vmem:[%s3 + $0x28] sm:$0xf]
      %v356 = vld [vmem:[%s3 + $0x2c] sm:$0xf]
      %v357 = vld [vmem:[%s3 + $0x30] sm:$0xf]
      %v358 = vld [vmem:[%s3 + $0x34] sm:$0xf]
      %v359 = vld [vmem:[%s3 + $0x38] sm:$0xf]
      %v360 = vld [vmem:[%s3 + $0x3c] sm:$0xf]
      %v361 = vld [vmem:[%s4] sm:$0x1]
      %v363 = vlaneseq
      %v364 = vshrl.u32 %v363, 7
      %v365 = vsub.s32 0, %v364
      %v366 = vrot.slane %v361, %v365
      %v384 = vunpack.c.l.b16 %v345
      %v385 = vunpack.c.l.b16 %v346
      %v386 = vunpack.c.l.b16 %v347
      %v387 = vunpack.c.l.b16 %v348
      %v388 = vunpack.c.l.b16 %v349
      %v389 = vunpack.c.l.b16 %v350
      %v390 = vunpack.c.l.b16 %v351
      %v391 = vunpack.c.l.b16 %v352
      %v392 = vunpack.c.l.b16 %v353
      %v393 = vunpack.c.l.b16 %v354
      %v394 = vunpack.c.l.b16 %v355
      %v395 = vunpack.c.l.b16 %v356
      %v396 = vunpack.c.l.b16 %v357
      %v397 = vunpack.c.l.b16 %v358
      %v398 = vunpack.c.l.b16 %v359
      %v399 = vunpack.c.l.b16 %v360
      %v400 = vpack.c.b16 %v385, %v384
      %v401 = vpack.c.b16 %v387, %v386
      %v402 = vpack.c.b16 %v389, %v388
      %v403 = vpack.c.b16 %v391, %v390
      %v404 = vpack.c.b16 %v393, %v392
      %v405 = vpack.c.b16 %v395, %v394
      %v406 = vpack.c.b16 %v397, %v396
      %v407 = vpack.c.b16 %v399, %v398
      %416 = vmatprep.subr.bf16.mxu0 0
      %417 = vmatpush1.bf16.msra.mxu0 %v400
      %418 = vmatprep.subr.bf16.mxu0 0
      %419 = vmatpush1.bf16.msra.mxu0 %v401
      %420 = vmatprep.subr.bf16.mxu0 0
      %421 = vmatpush1.bf16.msra.mxu0 %v402
      %422 = vmatprep.subr.bf16.mxu0 0
      %423 = vmatpush1.bf16.msra.mxu0 %v403
      %424 = vmatprep.subr.bf16.mxu0 0
      %425 = vmatpush1.bf16.msra.mxu0 %v404
      %426 = vmatprep.subr.bf16.mxu0 0
      %427 = vmatpush1.bf16.msra.mxu0 %v405
      %428 = vmatprep.subr.bf16.mxu0 0
      %429 = vmatpush1.bf16.msra.mxu0 %v406
      %430 = vmatprep.subr.bf16.mxu0 0
      %431 = vmatpush1.bf16.msra.mxu0 %v407
      %432 = vmatprep.subr.bf16.mxu0 0
      %433 = vmatpush1.bf16.msra.mxu0 0
      %434 = vmatprep.subr.bf16.mxu0 0
      %435 = vmatpush1.bf16.msra.mxu0 0
      %436 = vmatprep.subr.bf16.mxu0 0
      %437 = vmatpush1.bf16.msra.mxu0 0
      %438 = vmatprep.subr.bf16.mxu0 0
      %439 = vmatpush1.bf16.msra.mxu0 0
      %440 = vmatprep.subr.bf16.mxu0 0
      %441 = vmatpush1.bf16.msra.mxu0 0
      %442 = vmatprep.subr.bf16.mxu0 0
      %443 = vmatpush1.bf16.msra.mxu0 0
      %444 = vmatprep.subr.bf16.mxu0 0
      %445 = vmatpush1.bf16.msra.mxu0 0
      %446 = vmatprep.subr.bf16.mxu0 0
      %447 = vmatpush1.bf16.msra.mxu0 0
      %448 = vmatprep.mubr.bf16.mxu0 0
      %449 = vmatmul.mubr.bf16.gmra.mrb[0].mxu0 %v344
      %v450 = vpop.f32.mrb[0].mxu0
      %v451 = vadd.f32 %v366, %v450
      %v452 = vpop.f32.mrb[0].mxu0
      %v453 = vpop.f32.mrb[0].mxu0
      %v454 = vpop.f32.mrb[0].mxu0
      %455 = vdwg.mxu0
      %v456 = vmax.f32 %v451, 0.0
      %v457 = vpack.c.bf16 %v456, %v456
      %v458 = vld [vmem:[%s5] sm:$0xf]
      %v459 = vld [vmem:[%s5 + $0x4] sm:$0xf]
      %v460 = vld [vmem:[%s5 + $0x8] sm:$0xf]
      %v461 = vld [vmem:[%s5 + $0xc] sm:$0xf]
      %v462 = vld [vmem:[%s5 + $0x10] sm:$0xf]
      %v463 = vld [vmem:[%s5 + $0x14] sm:$0xf]
      %v464 = vld [vmem:[%s5 + $0x18] sm:$0xf]
      %v465 = vld [vmem:[%s5 + $0x1c] sm:$0xf]
      %v466 = vld [vmem:[%s5 + $0x20] sm:$0xf]
      %v467 = vld [vmem:[%s5 + $0x24] sm:$0xf]
      %v468 = vld [vmem:[%s5 + $0x28] sm:$0xf]
      %v469 = vld [vmem:[%s5 + $0x2c] sm:$0xf]
      %v470 = vld [vmem:[%s5 + $0x30] sm:$0xf]
      %v471 = vld [vmem:[%s5 + $0x34] sm:$0xf]
      %v472 = vld [vmem:[%s5 + $0x38] sm:$0xf]
      %v473 = vld [vmem:[%s5 + $0x3c] sm:$0xf]
      %v474 = vld [vmem:[%s6] sm:$0x1]
      %v476 = vlaneseq
      %v477 = vshrl.u32 %v476, 7
      %v478 = vsub.s32 0, %v477
      %v479 = vrot.slane %v474, %v478
      %v497 = vunpack.c.l.b16 %v458
      %v498 = vunpack.c.l.b16 %v459
      %v499 = vunpack.c.l.b16 %v460
      %v500 = vunpack.c.l.b16 %v461
      %v501 = vunpack.c.l.b16 %v462
      %v502 = vunpack.c.l.b16 %v463
      %v503 = vunpack.c.l.b16 %v464
      %v504 = vunpack.c.l.b16 %v465
      %v505 = vunpack.c.l.b16 %v466
      %v506 = vunpack.c.l.b16 %v467
      %v507 = vunpack.c.l.b16 %v468
      %v508 = vunpack.c.l.b16 %v469
      %v509 = vunpack.c.l.b16 %v470
      %v510 = vunpack.c.l.b16 %v471
      %v511 = vunpack.c.l.b16 %v472
      %v512 = vunpack.c.l.b16 %v473
      %v513 = vpack.c.b16 %v498, %v497
      %v514 = vpack.c.b16 %v500, %v499
      %v515 = vpack.c.b16 %v502, %v501
      %v516 = vpack.c.b16 %v504, %v503
      %v517 = vpack.c.b16 %v506, %v505
      %v518 = vpack.c.b16 %v508, %v507
      %v519 = vpack.c.b16 %v510, %v509
      %v520 = vpack.c.b16 %v512, %v511
      %529 = vmatprep.subr.bf16.mxu0 0
      %530 = vmatpush1.bf16.msra.mxu0 %v513
      %531 = vmatprep.subr.bf16.mxu0 0
      %532 = vmatpush1.bf16.msra.mxu0 %v514
      %533 = vmatprep.subr.bf16.mxu0 0
      %534 = vmatpush1.bf16.msra.mxu0 %v515
      %535 = vmatprep.subr.bf16.mxu0 0
      %536 = vmatpush1.bf16.msra.mxu0 %v516
      %537 = vmatprep.subr.bf16.mxu0 0
      %538 = vmatpush1.bf16.msra.mxu0 %v517
      %539 = vmatprep.subr.bf16.mxu0 0
      %540 = vmatpush1.bf16.msra.mxu0 %v518
      %541 = vmatprep.subr.bf16.mxu0 0
      %542 = vmatpush1.bf16.msra.mxu0 %v519
      %543 = vmatprep.subr.bf16.mxu0 0
      %544 = vmatpush1.bf16.msra.mxu0 %v520
      %545 = vmatprep.subr.bf16.mxu0 0
      %546 = vmatpush1.bf16.msra.mxu0 0
      %547 = vmatprep.subr.bf16.mxu0 0
      %548 = vmatpush1.bf16.msra.mxu0 0
      %549 = vmatprep.subr.bf16.mxu0 0
      %550 = vmatpush1.bf16.msra.mxu0 0
      %551 = vmatprep.subr.bf16.mxu0 0
      %552 = vmatpush1.bf16.msra.mxu0 0
      %553 = vmatprep.subr.bf16.mxu0 0
      %554 = vmatpush1.bf16.msra.mxu0 0
      %555 = vmatprep.subr.bf16.mxu0 0
      %556 = vmatpush1.bf16.msra.mxu0 0
      %557 = vmatprep.subr.bf16.mxu0 0
      %558 = vmatpush1.bf16.msra.mxu0 0
      %559 = vmatprep.subr.bf16.mxu0 0
      %560 = vmatpush1.bf16.msra.mxu0 0
      %561 = vmatprep.mubr.bf16.mxu0 0
      %562 = vmatmul.mubr.bf16.gmra.mrb[0].mxu0 %v457
      %v563 = vpop.f32.mrb[0].mxu0
      %v564 = vadd.f32 %v479, %v563
      %v565 = vpop.f32.mrb[0].mxu0
      %v566 = vpop.f32.mrb[0].mxu0
      %v567 = vpop.f32.mrb[0].mxu0
      %568 = vdwg.mxu0
      %vm569 = vcmask 64512
      %570 = vst.msk [vmem:[%s273] sm:$0xff] %vm569, %v564
      %p571 = scmp.lt.s32.totalorder %s18, 1
      %s572 = scalar_select %p571, %s18, 1
      %s573 = smul.addr %s572, 8
      %s574 = scalar_lea.vmem %s7, %s573
      // Predicated region
      $region49: #{ppo_policy_forward.1} parent=47 // pred_check
        %p575 = pneg %p188
      $region50: #{ppo_policy_forward.1} parent=47 // pred_check_branch
        %577 = sbr.rel (%p575) target = $region52
      $region51: #{ppo_policy_forward.1} parent=47 // pred_region
        _
      $region52: #{ppo_policy_forward.1} parent=47 // pred_fallthru
        _
    $region48: #{ppo_policy_forward.1} parent=5 // pred_fallthru
      _
    %p578 = scmp.le.s32.totalorder 2, %s13
    // Predicated region
    $region53: #{ppo_policy_forward.1} parent=5 // pred_check
      %p579 = pneg %p578
    $region54: #{ppo_policy_forward.1} parent=5 // pred_check_branch
      %581 = sbr.rel (%p579) target = $region56
    $region55: #{ppo_policy_forward.1} parent=5 // pred_region
      %s582 = ssub.s32 %s13, 2
      // Predicated region
      $region57: #{ppo_policy_forward.1} parent=55 // pred_check
        %p583 = pneg %p194
      $region58: #{ppo_policy_forward.1} parent=55 // pred_check_branch
        %585 = sbr.rel (%p583) target = $region60
      $region59: #{ppo_policy_forward.1} parent=55 // pred_region
        %p586 = scmp.lt.s32.totalorder %s19, 1
        %s587 = scalar_select %p586, %s19, 1
        %s588 = smul.addr %s587, 8
        %s589 = scalar_lea.vmem %s7, %s588
      $region60: #{ppo_policy_forward.1} parent=55 // pred_fallthru
        _
    $region56: #{ppo_policy_forward.1} parent=5 // pred_fallthru
      _
  $region6: #{ppo_policy_forward.1} parent=0 // loop_footer
    %s17 = sadd.s32 1, %s13
  $region7: #{ppo_policy_forward.1} parent=0 // loop_footer_branch
    %12 = sbr.rel target = $region3
  $region8: #{ppo_policy_forward.1} parent=0 // loop_exit
    _

</llo_original>
